<compile_context>
chip_gen: v7x
topology: tpu7x:2x2x1
jax: 0.10.0
libtpu: 0.0.40
codegen_flags: <defaults>
</compile_context>

<pallas_src>
import math

import jax
import jax.numpy as jnp
from jax.experimental import pallas as pl
from jax.experimental.pallas import tpu as pltpu

LANE = 128     # TPU lane width
SUBLANE = 8    # f32 sublanes per vreg


def _cmse_kernel(a_ref, b_ref, o_ref, acc_ref):
    """Grid (n_par, n_red); one (tm, 128) tile of each operand per step.

    Computes d = a - b and accumulates sum(d*d) folded onto an (8, 128)
    vreg-shaped VMEM accumulator (VPU adds only, no per-step cross-lane
    reduce).  The partial-sum slab for parallel index p is written on the
    last reduce step; the final reduction happens in the wrapper.
    """
    r = pl.program_id(1)

    @pl.when(r == 0)
    def _():
        acc_ref[...] = jnp.zeros_like(acc_ref)

    d = a_ref[...] - b_ref[...]                 # diff in-kernel (raw inputs streamed)
    sq = d * d                                  # VPU only
    # Fold the tile onto the (8, 128) accumulator; the reshape keeps the
    # (sublane, lane) minor layout so it is free.
    acc_ref[...] += jnp.sum(sq.reshape(-1, SUBLANE, LANE), axis=0)

    @pl.when(r == pl.num_programs(1) - 1)
    def _():
        o_ref[...] = acc_ref[...].reshape(1, SUBLANE, LANE)


def _interleaved_f32(x):
    """View x as float32.  complex64 -> trailing interleaved re/im pair via a
    zero-copy bitcast when available; falls back to an explicit real/imag
    stack (one extra HBM pass, still correct) otherwise."""
    if not jnp.iscomplexobj(x):
        return jnp.asarray(x, jnp.float32)
    if x.dtype == jnp.complex64:
        try:
            return jax.lax.bitcast_convert_type(x, jnp.float32)   # (..., 2) re/im
        except Exception:
            pass  # fall through to the copying path
    return jnp.stack([jnp.real(x).astype(jnp.float32),
                      jnp.imag(x).astype(jnp.float32)], axis=-1)


def complex_mse(inp, tgt, *, tm=8192, n_par=2):
    """Pallas ComplexMSE: mean(|(inp - tgt)**2|) over all (complex) elements.

    tm:    row tile (multiple of 8).  8192 rows * 128 lanes * f32 = 4 MiB per
           operand per buffer (16 MiB double-buffered) — sized for v6e/v7x and
           fine on v5e with the raised vmem limit below.
    n_par: parallel grid axis (contiguous halves) — megacore sharding on 2-TC
           v7x; harmless on single-TC v5e/v6e.
    """
    assert inp.shape == tgt.shape, "input and target must have the same shape"
    count = math.prod(inp.shape)                    # (complex) element count
    if count == 0:
        return jnp.asarray(jnp.nan, jnp.float32)    # torch.mean of empty -> nan

    a = _interleaved_f32(inp).reshape(-1)
    b = _interleaved_f32(tgt).reshape(-1)
    n_f = a.shape[0]                                # number of f32 scalars

    # Tiny inputs: a kernel launch is pure overhead (and this avoids
    # sub-(8,128) block edge cases).
    if n_f < SUBLANE * LANE:
        d = a - b
        return jnp.sum(d * d) / count

    # Lane alignment.  Rare path (flattened length not a multiple of 128)
    # costs one copy per operand; the common case is a zero-copy reshape.
    rem = (-n_f) % LANE
    if rem:
        a = jnp.pad(a, (0, rem))                    # zeros contribute 0
        b = jnp.pad(b, (0, rem))
    rows = (n_f + rem) // LANE
    a2 = a.reshape(rows, LANE)
    b2 = b.reshape(rows, LANE)

    # Row tiling: tile is a multiple of 8 (vreg sublanes) and <= rows.  The
    # kernel covers the largest prefix that is a whole number of tiles; the
    # (< one tile) remainder is reduced below with plain jnp (no full pad).
    tm_eff = min(tm, (rows // SUBLANE) * SUBLANE)
    n_blocks = rows // tm_eff
    rows_main = n_blocks * tm_eff
    n_par_eff = math.gcd(max(n_par, 1), n_blocks)
    n_red = n_blocks // n_par_eff

    # Contiguous halves per parallel index so each TC streams a contiguous
    # region of HBM on v7x.
    in_spec = pl.BlockSpec((tm_eff, LANE), lambda p, r: (p * n_red + r, 0))
    # NOTE: if a v7x profile still shows DMA gaps at step boundaries, add
    # pipeline_mode=pl.Buffered(3) to the input specs (+1 buffer per operand).

    block_bytes = tm_eff * LANE * 4
    vmem_limit = max(32 * 1024 * 1024, 4 * block_bytes + (2 << 20))

    n_main = rows_main * LANE
    cost = pl.CostEstimate(flops=3 * n_main, transcendentals=0,
                           bytes_accessed=2 * n_main * 4)

    partials = pl.pallas_call(
        _cmse_kernel,
        out_shape=jax.ShapeDtypeStruct((n_par_eff, SUBLANE, LANE), jnp.float32),
        grid_spec=pltpu.PrefetchScalarGridSpec(
            num_scalar_prefetch=0,
            grid=(n_par_eff, n_red),
            in_specs=[in_spec, in_spec],
            out_specs=pl.BlockSpec((1, SUBLANE, LANE), lambda p, r: (p, 0, 0)),
            scratch_shapes=[pltpu.VMEM((SUBLANE, LANE), jnp.float32)],
        ),
        compiler_params=pltpu.CompilerParams(
            dimension_semantics=("parallel", "arbitrary"),
            vmem_limit_bytes=vmem_limit,
        ),
        cost_estimate=cost,
    )(a2, b2)

    total = jnp.sum(partials)

    # Tail (< one row tile): tiny separate reduction, avoids padding/copying
    # the whole operands.
    tail_rows = rows - rows_main
    if tail_rows:
        ta = jax.lax.slice_in_dim(a2, rows_main, rows, axis=0)
        tb = jax.lax.slice_in_dim(b2, rows_main, rows, axis=0)
        dt = ta - tb
        total = total + jnp.sum(dt * dt)

    return total / count


if __name__ == "__main__":
    # Small deterministic complex inputs (B, C, H, W) = (2, 4, 16, 16)
    key = jax.random.PRNGKey(0)
    k1, k2, k3, k4 = jax.random.split(key, 4)
    shape = (2, 4, 16, 16)

    inp = (jax.random.normal(k1, shape, dtype=jnp.float32)
           + 1j * jax.random.normal(k2, shape, dtype=jnp.float32)).astype(jnp.complex64)
    tgt = (jax.random.normal(k3, shape, dtype=jnp.float32)
           + 1j * jax.random.normal(k4, shape, dtype=jnp.float32)).astype(jnp.complex64)

    result = complex_mse(inp, tgt)
    result = jax.block_until_ready(result)

    # Pure-JAX reference of the exact PyTorch expression
    ref = jnp.mean(jnp.abs((inp - tgt) ** 2))

    assert jnp.allclose(result, ref, rtol=1e-5, atol=1e-5), (result, ref)
    print("KERNEL_OK")
</pallas_src>

<mosaic_0001>
module attributes {stable_mosaic.version = 11 : i64} {
  func.func @_cmse_kernel(%arg0: i32, %arg1: i32, %arg2: memref<32x128xf32, #tpu.memory_space<vmem>>, %arg3: memref<32x128xf32, #tpu.memory_space<vmem>>, %arg4: memref<1x8x128xf32, #tpu.memory_space<vmem>>, %arg5: memref<8x128xf32, #tpu.memory_space<vmem>>) attributes {dimension_semantics = [#tpu.dimension_semantics<parallel>, #tpu.dimension_semantics<arbitrary>], iteration_bounds = array<i64: 1, 1>, scalar_prefetch = 0 : i64, scratch_operands = 1 : i64, tpu.core_type = #tpu.core_type<tc>, window_params = [{transform_indices = @transform_0, window_bounds = array<i64: 32, 128>}, {transform_indices = @transform_1, window_bounds = array<i64: 32, 128>}, {transform_indices = @transform_2, window_bounds = array<i64: 1, 8, 128>}]} {
    %c0_i32 = arith.constant 0 : i32
    %0 = arith.cmpi eq, %arg1, %c0_i32 : i32
    %1 = arith.extui %0 : i1 to i32
    %c0_i32_0 = arith.constant 0 : i32
    %2 = arith.cmpi ne, %1, %c0_i32_0 : i32
    scf.if %2 {
      %cst_10 = arith.constant 0.000000e+00 : f32
      %15 = vector.broadcast %cst_10 : f32 to vector<8x128xf32>
      %c0_11 = arith.constant 0 : index
      %c0_12 = arith.constant 0 : index
      %16 = vector.load %arg5[%c0_11, %c0_12] : memref<8x128xf32, #tpu.memory_space<vmem>>, vector<8x128xf32>
      tpu.vector_store %arg5[%c0_11, %c0_12], %15 {strides = array<i32>} : memref<8x128xf32, #tpu.memory_space<vmem>>, vector<8x128xf32>,
    } else {
    }
    %c0 = arith.constant 0 : index
    %c0_1 = arith.constant 0 : index
    %3 = vector.load %arg2[%c0, %c0_1] : memref<32x128xf32, #tpu.memory_space<vmem>>, vector<32x128xf32>
    %c0_2 = arith.constant 0 : index
    %c0_3 = arith.constant 0 : index
    %4 = vector.load %arg3[%c0_2, %c0_3] : memref<32x128xf32, #tpu.memory_space<vmem>>, vector<32x128xf32>
    %5 = arith.subf %3, %4 : vector<32x128xf32>
    %6 = arith.mulf %5, %5 : vector<32x128xf32>
    %c0_4 = arith.constant 0 : index
    %c0_5 = arith.constant 0 : index
    %7 = vector.load %arg5[%c0_4, %c0_5] : memref<8x128xf32, #tpu.memory_space<vmem>>, vector<8x128xf32>
    %8 = vector.shape_cast %6 : vector<32x128xf32> to vector<4x8x128xf32>
    %cst = arith.constant dense<0.000000e+00> : vector<8x128xf32>
    %9 = vector.multi_reduction <add>, %8, %cst [0] : vector<4x8x128xf32> to vector<8x128xf32>
    %10 = arith.addf %7, %9 : vector<8x128xf32>
    %c0_6 = arith.constant 0 : index
    %c0_7 = arith.constant 0 : index
    %11 = vector.load %arg5[%c0_6, %c0_7] : memref<8x128xf32, #tpu.memory_space<vmem>>, vector<8x128xf32>
    tpu.vector_store %arg5[%c0_6, %c0_7], %10 {strides = array<i32>} : memref<8x128xf32, #tpu.memory_space<vmem>>, vector<8x128xf32>,
    %c0_i32_8 = arith.constant 0 : i32
    %12 = arith.cmpi eq, %arg1, %c0_i32_8 : i32
    %13 = arith.extui %12 : i1 to i32
    %c0_i32_9 = arith.constant 0 : i32
    %14 = arith.cmpi ne, %13, %c0_i32_9 : i32
    scf.if %14 {
      %c0_10 = arith.constant 0 : index
      %c0_11 = arith.constant 0 : index
      %15 = vector.load %arg5[%c0_10, %c0_11] : memref<8x128xf32, #tpu.memory_space<vmem>>, vector<8x128xf32>
      %16 = vector.shape_cast %15 : vector<8x128xf32> to vector<1x8x128xf32>
      %c0_12 = arith.constant 0 : index
      %c0_13 = arith.constant 0 : index
      %c0_14 = arith.constant 0 : index
      %17 = vector.load %arg4[%c0_12, %c0_13, %c0_14] : memref<1x8x128xf32, #tpu.memory_space<vmem>>, vector<1x8x128xf32>
      tpu.vector_store %arg4[%c0_12, %c0_13, %c0_14], %16 {strides = array<i32>} : memref<1x8x128xf32, #tpu.memory_space<vmem>>, vector<1x8x128xf32>,
    } else {
    }
    return
  }
  func.func @transform_0(%arg0: i32, %arg1: i32) -> (i32, i32) {
    %c1_i32 = arith.constant 1 : i32
    %0 = arith.muli %arg0, %c1_i32 : i32
    %1 = arith.addi %0, %arg1 : i32
    %c0_i32 = arith.constant 0 : i32
    %c0_i32_0 = arith.constant 0 : i32
    return %1, %c0_i32 : i32, i32
  }
  func.func @transform_1(%arg0: i32, %arg1: i32) -> (i32, i32) {
    %c1_i32 = arith.constant 1 : i32
    %0 = arith.muli %arg0, %c1_i32 : i32
    %1 = arith.addi %0, %arg1 : i32
    %c0_i32 = arith.constant 0 : i32
    %c0_i32_0 = arith.constant 0 : i32
    return %1, %c0_i32 : i32, i32
  }
  func.func @transform_2(%arg0: i32, %arg1: i32) -> (i32, i32, i32) {
    %c0_i32 = arith.constant 0 : i32
    %c0_i32_0 = arith.constant 0 : i32
    %c0_i32_1 = arith.constant 0 : i32
    return %arg0, %c0_i32, %c0_i32_0 : i32, i32, i32
  }
}

</mosaic_0001>

<llo_original>
// kernel: tpu_custom_call.1
$region0: #{tpu_custom_call.1}
  #allocation0 [shape = 'u32[]', space=smem, size = 0x4, offset = 0x4, fixed_abs, tag = 'smem constant byte address 0x4 - core index']
  #allocation1 [shape = 'u32[144,128]{1,0:T(1,128)}', space=vmem, size = 0x12000, scoped, tag = 'internal scratch']
  #allocation2 [shape = 'f32[8,128]{1,0:T(8,128)}', space=vmem, size = 0x1000, scoped, tag = 'scratch operand']
  %s0 = inlined_call_operand.hbm [shape: f32[32,128], index: 0, kind: input, shape index: {}]
  %s1 = inlined_call_operand.hbm [shape: f32[32,128], index: 1, kind: input, shape index: {}]
  %s2 = inlined_call_operand.hbm [shape: f32[1,8,128], index: 2, kind: output, shape index: {}]
  %s3 = sld [smem:[#allocation0]]
  $region34: #{tpu_custom_call.1} parent=0
    _
  %s5 = ssub.s32 1, %s3
  %s6 = scalar_select 0, %s5, %s3
  $region1: #{tpu_custom_call.1} parent=0
    #allocation3 [shape = 'u8[16384]{0}', space=vmem, size = 0x4000, scoped, tag = 'input window, operand 0, single buffered']
    #allocation4 [shape = 's32[1]{0}', space=sflag, size = 0x4, scoped, tag = 'scoped memory for tpu_custom_call.1']
    #allocation5 [shape = 's32[1]{0}', space=sflag, size = 0x4, scoped, tag = 'scoped memory for tpu_custom_call.1']
    #allocation6 [shape = 'u8[16384]{0}', space=vmem, size = 0x4000, scoped, tag = 'input window, operand 1, single buffered']
    #allocation7 [shape = 's32[1]{0}', space=sflag, size = 0x4, scoped, tag = 'scoped memory for tpu_custom_call.1']
    #allocation8 [shape = 'u8[4096]{0}', space=vmem, size = 0x1000, scoped, tag = 'output window, operand 0, single buffered']
    %7 = vsyncpa [#allocation4], 0
    %8 = vsyncpa [#allocation7], 0
    %9 = vsyncpa [#allocation5], 0
    // Predicated region
    $region2: #{tpu_custom_call.1} parent=1 // pred_check
      _
    $region3: #{tpu_custom_call.1} parent=1 // pred_check_branch
      %11 = sbr.rel (0) target = $region5
    $region4: #{tpu_custom_call.1} parent=1 // pred_region
      %s12 = sadd.s32 0, 0
      %s13 = smul.u32 4, %s12
      %s15 = ssub.s32 512, 512
      %16 = vsyncadd [#allocation4], %s15
      %s17 = smul.addr %s13, 128
      %s18 = scalar_lea.hbm %s0, %s17
      %s19 = sshll.u32 [#allocation3], 4
      %s20 = int_to_ptr.vmem [resolvable:$true] %s19
      %25 = dma.hbm_to_vmem [thread:$0]  %s18, 512, %s20, [#allocation4], 128, 128, 8
    $region5: #{tpu_custom_call.1} parent=1 // pred_fallthru
      _
    // Predicated region
    $region6: #{tpu_custom_call.1} parent=1 // pred_check
      _
    $region7: #{tpu_custom_call.1} parent=1 // pred_check_branch
      %27 = sbr.rel (0) target = $region9
    $region8: #{tpu_custom_call.1} parent=1 // pred_region
      %s28 = sadd.s32 0, 0
      %s29 = smul.u32 4, %s28
      %s31 = ssub.s32 512, 512
      %32 = vsyncadd [#allocation7], %s31
      %s33 = smul.addr %s29, 128
      %s34 = scalar_lea.hbm %s1, %s33
      %s35 = sshll.u32 [#allocation6], 4
      %s36 = int_to_ptr.vmem [resolvable:$true] %s35
      %41 = dma.hbm_to_vmem [thread:$0]  %s34, 512, %s36, [#allocation7], 128, 128, 8
    $region9: #{tpu_custom_call.1} parent=1 // pred_fallthru
      _
    // Predicated region
    $region10: #{tpu_custom_call.1} parent=1 // pred_check
      _
    $region11: #{tpu_custom_call.1} parent=1 // pred_check_branch
      %43 = sbr.rel (0) target = $region13
    $region12: #{tpu_custom_call.1} parent=1 // pred_region
      %44 = dma.done [#allocation4], 512
    $region13: #{tpu_custom_call.1} parent=1 // pred_fallthru
      _
    // Predicated region
    $region14: #{tpu_custom_call.1} parent=1 // pred_check
      _
    $region15: #{tpu_custom_call.1} parent=1 // pred_check_branch
      %46 = sbr.rel (0) target = $region17
    $region16: #{tpu_custom_call.1} parent=1 // pred_region
      %47 = dma.done [#allocation7], 512
    $region17: #{tpu_custom_call.1} parent=1 // pred_fallthru
      _
    %s48 = sadd.s32 0, 0
    %s49 = smul.u32 4, %s48
    %s50 = sadd.s32 0, 0
    %s51 = smul.u32 4, %s50
    %p52 = scmp.eq.s32.totalorder 0, 0
    // Predicated region
    $region18: #{tpu_custom_call.1} parent=1 // pred_check
      %p53 = pneg %p52
    $region19: #{tpu_custom_call.1} parent=1 // pred_check_branch
      %55 = sbr.rel (%p53) target = $region21
    $region20: #{tpu_custom_call.1} parent=1 // pred_region
      %56 = vst [vmem:[#allocation2] sm:$0xff] 0.0
    $region21: #{tpu_custom_call.1} parent=1 // pred_fallthru
      _
    %v57 = vld [vmem:[#allocation3] sm:$0xff]
    %v58 = vld [vmem:[#allocation3 + $0x8] sm:$0xff]
    %v59 = vld [vmem:[#allocation3 + $0x10] sm:$0xff]
    %v60 = vld [vmem:[#allocation3 + $0x18] sm:$0xff]
    %v61 = vld [vmem:[#allocation6] sm:$0xff]
    %v62 = vld [vmem:[#allocation6 + $0x8] sm:$0xff]
    %v63 = vld [vmem:[#allocation6 + $0x10] sm:$0xff]
    %v64 = vld [vmem:[#allocation6 + $0x18] sm:$0xff]
    %v65 = vsub.f32 %v57, %v61
    %v66 = vsub.f32 %v58, %v62
    %v67 = vsub.f32 %v59, %v63
    %v68 = vsub.f32 %v60, %v64
    %v69 = vmul.f32 %v65, %v65
    %v70 = vmul.f32 %v66, %v66
    %v71 = vmul.f32 %v67, %v67
    %v72 = vmul.f32 %v68, %v68
    %v73 = vld [vmem:[#allocation2] sm:$0xff]
    %v74 = vadd.f32 %v69, %v70
    %v75 = vadd.f32 %v74, %v71
    %v76 = vadd.f32 %v75, %v72
    %v77 = vadd.f32 %v73, %v76
    %78 = vst [vmem:[#allocation2] sm:$0xff] %v77
    // Predicated region
    $region22: #{tpu_custom_call.1} parent=1 // pred_check
      %p79 = pneg %p52
    $region23: #{tpu_custom_call.1} parent=1 // pred_check_branch
      %81 = sbr.rel (%p79) target = $region25
    $region24: #{tpu_custom_call.1} parent=1 // pred_region
      %v82 = vld [vmem:[#allocation2] sm:$0xff]
      %83 = vst [vmem:[#allocation8] sm:$0xff] %v82
    $region25: #{tpu_custom_call.1} parent=1 // pred_fallthru
      _
    // Predicated region
    $region26: #{tpu_custom_call.1} parent=1 // pred_check
      _
    $region27: #{tpu_custom_call.1} parent=1 // pred_check_branch
      %85 = sbr.rel (0) target = $region29
    $region28: #{tpu_custom_call.1} parent=1 // pred_region
      %s87 = ssub.s32 128, 128
      %88 = vsyncadd [#allocation5], %s87
      %s90 = sshll.u32 [#allocation8], 4
      %s91 = int_to_ptr.vmem [resolvable:$true] %s90
      %93 = dma.vmem_to_hbm [thread:$0]  %s91, 128, %s2, [#allocation5]
    $region29: #{tpu_custom_call.1} parent=1 // pred_fallthru
      _
    // Predicated region
    $region30: #{tpu_custom_call.1} parent=1 // pred_check
      _
    $region31: #{tpu_custom_call.1} parent=1 // pred_check_branch
      %95 = sbr.rel (0) target = $region33
    $region32: #{tpu_custom_call.1} parent=1 // pred_region
      %96 = dma.done [#allocation5], 128
    $region33: #{tpu_custom_call.1} parent=1 // pred_fallthru
      _
    %97 = vsyncpa [#allocation4], 1
    %98 = vsyncpa [#allocation7], 1
    %99 = vsyncpa [#allocation5], 1

</llo_original>
